<compile_context>
chip_gen: v7x
topology: tpu7x:2x2x1
jax: 0.10.0
libtpu: 0.0.40
codegen_flags: <defaults>
</compile_context>

<pallas_src>
import functools

import jax
import jax.numpy as jnp
from jax.experimental import pallas as pl
from jax.experimental.pallas import tpu as pltpu


def _round_up(n, m):
    return ((n + m - 1) // m) * m


def _linear_kernel(x_ref, w_ref, b_ref, o_ref):
    # x_ref: (TB, D) VMEM   w_ref: (1, D) VMEM   b_ref: (1,) SMEM   o_ref: (TB, 1)
    x = x_ref[...].astype(jnp.float32)
    w = w_ref[...].astype(jnp.float32)                 # broadcast (1, D) over (TB, D)
    s = jnp.sum(x * w, axis=-1, keepdims=True)         # f32 accumulate, lane reduce -> (TB, 1)
    o_ref[...] = (s + b_ref[0]).astype(o_ref.dtype)


@functools.partial(jax.jit, static_argnames=("target_tile_bytes", "tile_rows"))
def linear_regression_forward(x, weight, bias, *,
                              target_tile_bytes=8 * 1024 * 1024,
                              tile_rows=None):
    """x: (B, D); weight: (1, D) [PyTorch nn.Linear layout]; bias: (1,).

    Returns (B, 1), matching nn.Linear(input_dim, 1).
    """
    B, D = x.shape

    # Per-row VMEM footprint uses the lane-padded width (VMEM tiles are laid
    # out on (8, 128) vregs), conservatively at 4 bytes/elem.
    lane_d = _round_up(D, 128)
    bytes_per_row = lane_d * 4

    if tile_rows is None:
        tb = (target_tile_bytes // bytes_per_row) // 8 * 8
    else:
        tb = (tile_rows // 8) * 8
    tb = max(8, tb)
    tb = min(tb, _round_up(B, 8))          # never larger than needed

    num_tiles = pl.cdiv(B, tb)             # ragged last block handled by Pallas

    out = pl.pallas_call(
        _linear_kernel,
        out_shape=jax.ShapeDtypeStruct((B, 1), x.dtype),
        grid=(num_tiles,),
        in_specs=[
            pl.BlockSpec((tb, D), lambda i: (i, 0)),            # streamed x tiles
            pl.BlockSpec((1, D), lambda i: (0, 0)),             # resident lane-dense weight row
            pl.BlockSpec(memory_space=pltpu.MemorySpace.SMEM),  # scalar bias in SMEM
        ],
        out_specs=pl.BlockSpec((tb, 1), lambda i: (i, 0)),
        compiler_params=pltpu.CompilerParams(
            dimension_semantics=("parallel",),
            vmem_limit_bytes=32 * 1024 * 1024,
        ),
    )(x, weight, bias)

    return out


if __name__ == "__main__":
    key = jax.random.PRNGKey(0)
    k_x, k_w, k_b = jax.random.split(key, 3)

    batch, input_dim = 8, 32

    # Deterministic parameter init (mimics nn.Linear uniform(-1/sqrt(D), 1/sqrt(D)))
    bound = 1.0 / jnp.sqrt(jnp.float32(input_dim))
    weight = jax.random.uniform(k_w, (1, input_dim), jnp.float32, -bound, bound)
    bias = jax.random.uniform(k_b, (1,), jnp.float32, -bound, bound)

    x = jax.random.normal(k_x, (batch, input_dim), jnp.float32)

    y = linear_regression_forward(x, weight, bias)
    y = jax.block_until_ready(y)

    y_ref = x @ weight.T + bias
    assert y.shape == (batch, 1)
    assert jnp.allclose(y, y_ref, atol=1e-5, rtol=1e-5)

    # Exercise the multi-tile pipelined path with a ragged (non-multiple) last
    # block: grid = cdiv(300, 128) = 3, last block has 44 valid rows.
    batch2 = 300
    x2 = jax.random.normal(k_x, (batch2, input_dim), jnp.float32)
    y2 = linear_regression_forward(x2, weight, bias, tile_rows=128)
    y2 = jax.block_until_ready(y2)
    y2_ref = x2 @ weight.T + bias
    assert y2.shape == (batch2, 1)
    assert jnp.allclose(y2, y2_ref, atol=1e-5, rtol=1e-5)

    print("KERNEL_OK")
</pallas_src>

<mosaic_0001>
module attributes {stable_mosaic.version = 11 : i64} {
  func.func @_linear_kernel(%arg0: i32, %arg1: memref<8x32xf32, #tpu.memory_space<vmem>>, %arg2: memref<1x32xf32, #tpu.memory_space<vmem>>, %arg3: memref<1xf32, #tpu.memory_space<smem>>, %arg4: memref<8x1xf32, #tpu.memory_space<vmem>>) attributes {dimension_semantics = [#tpu.dimension_semantics<parallel>], iteration_bounds = array<i64: 1>, scalar_prefetch = 0 : i64, scratch_operands = 0 : i64, tpu.core_type = #tpu.core_type<tc>, window_params = [{transform_indices = @transform_0, window_bounds = array<i64: 8, 32>}, {pipeline_mode = #tpu.pipeline_mode<synchronous>, transform_indices = @transform_1, window_bounds = array<i64: 1, 32>}, {transform_indices = @transform_2, window_bounds = array<i64: 1>}, {transform_indices = @transform_3, window_bounds = array<i64: 8, 1>}]} {
    %c0 = arith.constant 0 : index
    %c0_0 = arith.constant 0 : index
    %0 = vector.load %arg1[%c0, %c0_0] : memref<8x32xf32, #tpu.memory_space<vmem>>, vector<8x32xf32>
    %c0_1 = arith.constant 0 : index
    %c0_2 = arith.constant 0 : index
    %1 = vector.load %arg2[%c0_1, %c0_2] : memref<1x32xf32, #tpu.memory_space<vmem>>, vector<1x32xf32>
    %2 = vector.broadcast %1 : vector<1x32xf32> to vector<8x32xf32>
    %3 = arith.mulf %0, %2 : vector<8x32xf32>
    %cst = arith.constant dense<0.000000e+00> : vector<8xf32>
    %4 = vector.multi_reduction <add>, %3, %cst [1] : vector<8x32xf32> to vector<8xf32>
    %5 = vector.shape_cast %4 : vector<8xf32> to vector<8x1xf32>
    %c0_3 = arith.constant 0 : index
    %6 = memref.load %arg3[%c0_3] : memref<1xf32, #tpu.memory_space<smem>>
    %7 = vector.broadcast %6 : f32 to vector<8x1xf32>
    %8 = arith.addf %5, %7 : vector<8x1xf32>
    %c0_4 = arith.constant 0 : index
    %c0_5 = arith.constant 0 : index
    %9 = vector.load %arg4[%c0_4, %c0_5] : memref<8x1xf32, #tpu.memory_space<vmem>>, vector<8x1xf32>
    tpu.vector_store %arg4[%c0_4, %c0_5], %8 {strides = array<i32>} : memref<8x1xf32, #tpu.memory_space<vmem>>, vector<8x1xf32>,
    return
  }
  func.func @transform_0(%arg0: i32) -> (i32, i32) {
    %c0_i32 = arith.constant 0 : i32
    %c0_i32_0 = arith.constant 0 : i32
    return %arg0, %c0_i32 : i32, i32
  }
  func.func @transform_1(%arg0: i32) -> (i32, i32) {
    %c0_i32 = arith.constant 0 : i32
    %c0_i32_0 = arith.constant 0 : i32
    %c0_i32_1 = arith.constant 0 : i32
    return %c0_i32, %c0_i32_0 : i32, i32
  }
  func.func @transform_2(%arg0: i32) -> i32 {
    %c0_i32 = arith.constant 0 : i32
    %c0_i32_0 = arith.constant 0 : i32
    return %c0_i32 : i32
  }
  func.func @transform_3(%arg0: i32) -> (i32, i32) {
    %c0_i32 = arith.constant 0 : i32
    %c0_i32_0 = arith.constant 0 : i32
    return %arg0, %c0_i32 : i32, i32
  }
}

</mosaic_0001>

<llo_original>
// kernel: linear_regression_forward.1
$region0: #{linear_regression_forward.1}
  #allocation0 [shape = 'u32[]', space=smem, size = 0x4, offset = 0x4, fixed_abs, tag = 'smem constant byte address 0x4 - core index']
  #allocation1 [shape = 'u32[144,128]{1,0:T(1,128)}', space=vmem, size = 0x12000, scoped, tag = 'internal scratch']
  #allocation2 [shape = 'f32[1]{0:T(128)S(6)}', space=smem, size = 0x200, scoped, tag = 'scoped memory for linear_regression_forward.1']
  %s0 = inlined_call_operand.hbm [shape: f32[8,32], index: 0, kind: input, shape index: {}]
  %s1 = inlined_call_operand.vmem [shape: f32[1,32], index: 1, kind: input, shape index: {}]
  %s2 = inlined_call_operand.<no memory space> [shape: f32[1], index: 2, kind: input, shape index: {}]
  %s3 = inlined_call_operand.vmem [shape: f32[8,1], index: 3, kind: output, shape index: {}]
  %s4 = sld [smem:[#allocation0]]
  $region26: #{linear_regression_forward.1} parent=0
    _
  %s6 = ssub.s32 1, %s4
  %s7 = scalar_select 0, %s6, %s4
  %8 = sst [smem:[#allocation2]] %s2
  $region1: #{linear_regression_forward.1} parent=0
    #allocation3 [shape = 'u8[4096]{0}', space=vmem, size = 0x1000, scoped, tag = 'input window, operand 0, single buffered']
    #allocation4 [shape = 's32[1]{0}', space=sflag, size = 0x4, scoped, tag = 'scoped memory for linear_regression_forward.1']
    %9 = vsyncpa [#allocation4], 0
    // Predicated region
    $region2: #{linear_regression_forward.1} parent=1 // pred_check
      _
    $region3: #{linear_regression_forward.1} parent=1 // pred_check_branch
      %11 = sbr.rel (0) target = $region5
    $region4: #{linear_regression_forward.1} parent=1 // pred_region
      %s13 = ssub.s32 128, 128
      %14 = vsyncadd [#allocation4], %s13
      %s16 = sshll.u32 [#allocation3], 4
      %s17 = int_to_ptr.vmem [resolvable:$true] %s16
      %19 = dma.hbm_to_vmem [thread:$0]  %s0, 128, %s17, [#allocation4]
    $region5: #{linear_regression_forward.1} parent=1 // pred_fallthru
      _
    // Predicated region
    $region6: #{linear_regression_forward.1} parent=1 // pred_check
      _
    $region7: #{linear_regression_forward.1} parent=1 // pred_check_branch
      %21 = sbr.rel (0) target = $region9
    $region8: #{linear_regression_forward.1} parent=1 // pred_region
      _
    $region9: #{linear_regression_forward.1} parent=1 // pred_fallthru
      _
    // Predicated region
    $region10: #{linear_regression_forward.1} parent=1 // pred_check
      _
    $region11: #{linear_regression_forward.1} parent=1 // pred_check_branch
      %23 = sbr.rel (0) target = $region13
    $region12: #{linear_regression_forward.1} parent=1 // pred_region
      _
    $region13: #{linear_regression_forward.1} parent=1 // pred_fallthru
      _
    // Predicated region
    $region14: #{linear_regression_forward.1} parent=1 // pred_check
      _
    $region15: #{linear_regression_forward.1} parent=1 // pred_check_branch
      %25 = sbr.rel (0) target = $region17
    $region16: #{linear_regression_forward.1} parent=1 // pred_region
      %26 = dma.done [#allocation4], 128
    $region17: #{linear_regression_forward.1} parent=1 // pred_fallthru
      _
    %v27 = vld [vmem:[#allocation3] sm:$0xff]
    %v28 = vld [vmem:[%s1] sm:$0x1]
    %v30 = vlaneseq
    %v31 = vshrl.u32 %v30, 7
    %v32 = vsub.s32 0, %v31
    %v33 = vrot.slane %v28, %v32
    %v35 = vmul.f32 %v27, %v33
    %vm36 = vcmask 261120
    %v37 = vsel %vm36, %v35, 0.0
    %38 = vadd.xlane.f32.xlu0 %v37
    %v39 = vpop.xlane.xlu0 %38
    %s40 = sld [smem:[#allocation2]]
    %v41 = vstv %s40
    %v42 = vadd.f32 %v39, %v41
    %vm43 = vcmask 7168
    %44 = vst.msk [vmem:[%s3] sm:$0xff] %vm43, %v42
    // Predicated region
    $region18: #{linear_regression_forward.1} parent=1 // pred_check
      _
    $region19: #{linear_regression_forward.1} parent=1 // pred_check_branch
      %46 = sbr.rel (0) target = $region21
    $region20: #{linear_regression_forward.1} parent=1 // pred_region
      _
    $region21: #{linear_regression_forward.1} parent=1 // pred_fallthru
      _
    // Predicated region
    $region22: #{linear_regression_forward.1} parent=1 // pred_check
      _
    $region23: #{linear_regression_forward.1} parent=1 // pred_check_branch
      %48 = sbr.rel (0) target = $region25
    $region24: #{linear_regression_forward.1} parent=1 // pred_region
      _
    $region25: #{linear_regression_forward.1} parent=1 // pred_fallthru
      _
    %49 = vsyncpa [#allocation4], 1

</llo_original>
